<compile_context>
chip_gen: v7x
topology: tpu7x:2x2x1
jax: 0.10.0
libtpu: 0.0.40
codegen_flags: <defaults>
</compile_context>

<pallas_src>
import numpy as np
import jax
import jax.numpy as jnp
from jax.experimental import pallas as pl
from jax.experimental.pallas import tpu as pltpu

EPS = 1e-5
KH = KW = 3          # kernel_sizes = 3 (module default)
NTAPS = KH * KW


# ----------------------------------------------------------------------------
# Pallas kernel: fused HyperPatchInvertedResidual (expand_ratio=1, stride=1)
# for one whole decoder level, lane-dense over every pixel of the batch.
# ----------------------------------------------------------------------------
def _hpir_level_kernel(xt_ref, wd_ref, bd_ref, wp_ref, bp_ref, o_ref):
    """depthwise 3x3 hyper-conv (+BN1 folded) -> ReLU6 -> pointwise hyper-conv (+BN2 folded).

    xt_ref: (9, C, L)   nine tap-shifted views of the reflect-padded input,
                        lanes = all B*H*W pixels (multiple of 128)
    wd_ref: (9, C, L)   per-pixel depthwise weights (BN1 scale folded in)
    bd_ref: (C, L)      per-pixel depthwise bias   (BN1 affine folded in)
    wp_ref: (C, Co, L)  per-pixel pointwise weights (BN2 scale folded in)
    bp_ref: (Co, L)     per-pixel pointwise bias    (BN2 affine folded in)
    o_ref : (Co, L)
    """
    n_taps, n_in, L = xt_ref.shape
    n_out = o_ref.shape[0]

    # Depthwise 3x3: per-pixel scalar weight per tap -> pure VPU FMAs.
    acc = bd_ref[...]
    for t in range(n_taps):
        acc = acc + xt_ref[t] * wd_ref[t]
    h = jnp.clip(acc, 0.0, 6.0)                       # ReLU6 (BN1 already folded)

    # Pointwise 1x1: accumulate over input channels with VPU FMAs
    # (per-patch matrices are far too small to keep the MXU pipeline busy).
    y = bp_ref[...]
    for c in range(n_in):
        y = y + wp_ref[c] * jnp.broadcast_to(h[c:c + 1, :], (n_out, L))
    o_ref[...] = y.astype(o_ref.dtype)                # single unmasked lane-dense store


def _pallas_apply(xt, wd, bd, wp, bp):
    Co, L = bp.shape
    vmem = lambda: pl.BlockSpec(memory_space=pltpu.MemorySpace.VMEM)
    return pl.pallas_call(
        _hpir_level_kernel,
        out_shape=jax.ShapeDtypeStruct((Co, L), jnp.float32),
        in_specs=[vmem() for _ in range(5)],
        out_specs=vmem(),
    )(xt, wd, bd, wp, bp)


# Pure-JAX reference of exactly the same per-pixel math (for verification).
def _reference_apply(xt, wd, bd, wp, bp):
    acc = jnp.sum(xt * wd, axis=0) + bd               # (C, L)
    h = jnp.clip(acc, 0.0, 6.0)
    y = jnp.einsum('col,cl->ol', wp, h) + bp          # (Co, L)
    return y


# ----------------------------------------------------------------------------
# Glue: coordinates, bilinear resize, hyper-signal unpacking, per-pixel expand.
# ----------------------------------------------------------------------------
def get_image_coordinates(b, h, w):
    x = jnp.linspace(-1.0, 1.0, w, dtype=jnp.float32)
    y = jnp.linspace(-1.0, 1.0, h, dtype=jnp.float32)
    X = jnp.broadcast_to(x[None, :], (h, w))
    Y = jnp.broadcast_to(y[:, None], (h, w))
    grid = jnp.stack([X, Y], axis=0)                  # channel 0 = x, channel 1 = y
    return jnp.broadcast_to(grid[None], (b, 2, h, w))


def bilinear_resize_nchw(x, out_h, out_w):
    """F.interpolate(mode='bilinear', align_corners=False) semantics."""
    B, C, H, W = x.shape

    def idx(out_size, in_size):
        scale = in_size / out_size
        s = (jnp.arange(out_size, dtype=jnp.float32) + 0.5) * scale - 0.5
        s = jnp.maximum(s, 0.0)
        i0 = jnp.floor(s).astype(jnp.int32)
        i0 = jnp.minimum(i0, in_size - 1)
        i1 = jnp.minimum(i0 + 1, in_size - 1)
        frac = s - i0.astype(jnp.float32)
        return i0, i1, frac

    y0, y1, fy = idx(out_h, H)
    x0, x1, fx = idx(out_w, W)
    top = x[:, :, y0, :]
    bot = x[:, :, y1, :]

    def lerp_cols(v):
        return v[:, :, :, x0] * (1.0 - fx) + v[:, :, :, x1] * fx

    top = lerp_cols(top)
    bot = lerp_cols(bot)
    fy = fy[None, None, :, None]
    return top * (1.0 - fy) + bot * fy


def apply_hpir_level(p, level_w, bn1, bn2, out_nc, fh, fw, apply_fn):
    """One decoder level = HyperPatchInvertedResidual(in_nc, out_nc, 3, expand_ratio=1).

    p:       (B, C, H, W)                feature map (NCHW)
    level_w: (B, hyper_params, fh, fw)   per-patch hyper weights signal
    """
    B, C, H, W = p.shape
    ph, pw = H // fh, W // fw
    L = B * H * W
    Np = B * fh * fw
    Co = out_nc

    # --- unpack the hyper signal into per-patch conv weights/biases ---
    P = level_w.shape[1]
    sig = jnp.transpose(level_w, (0, 2, 3, 1)).reshape(Np, P)
    o = 0
    wd = sig[:, o:o + C * NTAPS].reshape(Np, C, NTAPS); o += C * NTAPS  # dw (C,1,3,3)
    bd = sig[:, o:o + C];                               o += C          # dw bias
    wp = sig[:, o:o + Co * C].reshape(Np, Co, C);       o += Co * C     # pw (Co,C,1,1)
    bp = sig[:, o:o + Co];                              o += Co         # pw bias
    assert o == P

    # --- fold eval-mode BatchNorm into the conv weights / biases ---
    def fold(bn):
        gamma, beta, mean, var = bn
        s = gamma * jax.lax.rsqrt(var + EPS)
        return s, beta - mean * s

    s1, t1 = fold(bn1)                                  # (C,)
    s2, t2 = fold(bn2)                                  # (Co,)
    wd = wd * s1[None, :, None]
    bd = bd * s1[None, :] + t1[None, :]
    wp = wp * s2[None, :, None]
    bp = bp * s2[None, :] + t2[None, :]

    # --- expand per-patch params to per-pixel, lane order = (b, h, w) ---
    def expand(a):
        trailing = a.shape[1:]
        a = a.reshape(B, fh, fw, *trailing)
        a = jnp.repeat(a, ph, axis=1)                   # (B, H, fw, ...)
        a = jnp.repeat(a, pw, axis=2)                   # (B, H, W, ...)
        perm = tuple(range(3, 3 + len(trailing))) + (0, 1, 2)
        return jnp.transpose(a, perm).reshape(*trailing, L)

    wd_exp = expand(jnp.transpose(wd, (0, 2, 1)))       # (9, C, L)
    bd_exp = expand(bd)                                 # (C, L)
    wp_exp = expand(jnp.transpose(wp, (0, 2, 1)))       # (C, Co, L)
    bp_exp = expand(bp)                                 # (Co, L)

    # --- reflect padding (padding_mode='reflect') + 9 tap-shifted views,
    #     lane-dense over all pixels of the batch ---
    x_pad = jnp.pad(p, ((0, 0), (0, 0), (1, 1), (1, 1)), mode='reflect')
    taps = [x_pad[:, :, dy:dy + H, dx:dx + W] for dy in range(KH) for dx in range(KW)]
    xt = jnp.stack(taps, axis=0)                        # (9, B, C, H, W)
    xt = jnp.transpose(xt, (0, 2, 1, 3, 4)).reshape(NTAPS, C, L)

    out = apply_fn(xt, wd_exp, bd_exp, wp_exp, bp_exp)  # (Co, L)
    out = out.reshape(Co, B, H, W)
    return jnp.transpose(out, (1, 0, 2, 3))
    # TODO(synk): residual connection of HyperPatchInvertedResidual is skipped:
    # in this decoder in_nc = prev_channels + 2 != out_nc, so use_res_connect is False.


# ----------------------------------------------------------------------------
# Decoder construction (mirrors MultiScaleDecoder.__init__ channel bookkeeping)
# ----------------------------------------------------------------------------
def build_decoder_config(feat_channels, num_classes, level_layers=1):
    feat_rev = feat_channels[::-1]
    levels = len(feat_rev)
    prev = 0
    cfg = []
    for level in range(levels):
        curr_ngf = feat_rev[level]
        prev += curr_ngf
        layers = []
        for layer in range(level_layers):
            if level == levels - 1 and layer == level_layers - 1:
                curr_ngf = num_classes                 # with_out_fc=False path
            layers.append((prev + 2, curr_ngf))        # +2 for image coordinates
            prev = curr_ngf
        cfg.append(layers)
    return cfg


def level_hyper_params(in_nc, out_nc):
    # hidden = in_nc (expand_ratio=1): dw 3x3 weight+bias, pw 1x1 weight+bias
    return in_nc * NTAPS + in_nc + out_nc * in_nc + out_nc


def init_bn(c, offset):
    i = np.arange(c, dtype=np.float32)
    gamma = 1.0 + 0.05 * np.cos(i + offset)
    beta = 0.05 * np.sin(0.5 * i + offset)
    mean = 0.02 * np.sin(i + offset)
    var = 1.0 + 0.1 * np.cos(0.3 * i + offset) ** 2
    return tuple(jnp.asarray(v) for v in (gamma, beta, mean, var))


def multi_scale_decoder_forward(xs, ws, cfg, bn_params, patch_grid, apply_fn):
    p = None
    for level in range(len(xs)):
        feat = xs[-level - 1]
        if p is None:
            p = feat
        else:
            if p.shape[2:] != feat.shape[2:]:
                p = bilinear_resize_nchw(p, feat.shape[2], feat.shape[3])
            p = jnp.concatenate([feat, p], axis=1)
        B, _, H, W = p.shape
        p = jnp.concatenate([get_image_coordinates(B, H, W), p], axis=1)
        (in_nc, out_nc), = cfg[level]                  # level_layers == 1
        assert p.shape[1] == in_nc, (p.shape, in_nc)
        bn1, bn2 = bn_params[level]
        fh, fw = patch_grid[level]
        p = apply_hpir_level(p, ws[level], bn1, bn2, out_nc, fh, fw, apply_fn)
    return p


# ----------------------------------------------------------------------------
# Main
# ----------------------------------------------------------------------------
if __name__ == "__main__":
    feat_channels = [8, 16]       # x[0]: (B,8,16,16) high-res, x[1]: (B,16,8,8) low-res
    num_classes = 3
    B = 2
    cfg = build_decoder_config(feat_channels, num_classes)
    patch_grid = [(2, 2), (2, 2)]     # hyper-signal spatial resolution per level

    key = jax.random.PRNGKey(0)
    k0, k1, k2 = jax.random.split(key, 3)
    x0 = jax.random.normal(k0, (B, 8, 16, 16), dtype=jnp.float32)
    x1 = jax.random.normal(k1, (B, 16, 8, 8), dtype=jnp.float32)
    xs = [x0, x1]

    ws = []
    bn_params = []
    wkeys = jax.random.split(k2, len(cfg))
    for level, ((in_nc, out_nc),) in enumerate(cfg):
        P = level_hyper_params(in_nc, out_nc)
        fh, fw = patch_grid[level]
        ws.append(0.2 * jax.random.normal(wkeys[level], (B, P, fh, fw), dtype=jnp.float32))
        bn_params.append((init_bn(in_nc, float(level)), init_bn(out_nc, float(level) + 0.5)))

    out = multi_scale_decoder_forward(xs, ws, cfg, bn_params, patch_grid, _pallas_apply)
    out = jax.block_until_ready(out)

    ref = multi_scale_decoder_forward(xs, ws, cfg, bn_params, patch_grid, _reference_apply)
    ref = jax.block_until_ready(ref)

    assert out.shape == (B, num_classes, 16, 16), out.shape
    np.testing.assert_allclose(np.asarray(out), np.asarray(ref), atol=1e-4, rtol=1e-4)
    print("KERNEL_OK")
</pallas_src>

<mosaic_0001>
module attributes {stable_mosaic.version = 11 : i64} {
  func.func @_hpir_level_kernel(%arg0: memref<9x18x128xf32, #tpu.memory_space<vmem>>, %arg1: memref<9x18x128xf32, #tpu.memory_space<vmem>>, %arg2: memref<18x128xf32, #tpu.memory_space<vmem>>, %arg3: memref<18x16x128xf32, #tpu.memory_space<vmem>>, %arg4: memref<16x128xf32, #tpu.memory_space<vmem>>, %arg5: memref<16x128xf32, #tpu.memory_space<vmem>>) attributes {dimension_semantics = [], scalar_prefetch = 0 : i64, scratch_operands = 0 : i64, tpu.core_type = #tpu.core_type<tc>} {
    %c0 = arith.constant 0 : index
    %c0_0 = arith.constant 0 : index
    %0 = vector.load %arg2[%c0, %c0_0] : memref<18x128xf32, #tpu.memory_space<vmem>>, vector<18x128xf32>
    %c0_1 = arith.constant 0 : index
    %c0_2 = arith.constant 0 : index
    %c0_3 = arith.constant 0 : index
    %1 = vector.load %arg0[%c0_1, %c0_2, %c0_3] : memref<9x18x128xf32, #tpu.memory_space<vmem>>, vector<1x18x128xf32>
    %2 = vector.shape_cast %1 : vector<1x18x128xf32> to vector<18x128xf32>
    %c0_4 = arith.constant 0 : index
    %c0_5 = arith.constant 0 : index
    %c0_6 = arith.constant 0 : index
    %3 = vector.load %arg1[%c0_4, %c0_5, %c0_6] : memref<9x18x128xf32, #tpu.memory_space<vmem>>, vector<1x18x128xf32>
    %4 = vector.shape_cast %3 : vector<1x18x128xf32> to vector<18x128xf32>
    %5 = arith.mulf %2, %4 : vector<18x128xf32>
    %6 = arith.addf %0, %5 : vector<18x128xf32>
    %c1 = arith.constant 1 : index
    %c0_7 = arith.constant 0 : index
    %c0_8 = arith.constant 0 : index
    %7 = vector.load %arg0[%c1, %c0_7, %c0_8] : memref<9x18x128xf32, #tpu.memory_space<vmem>>, vector<1x18x128xf32>
    %8 = vector.shape_cast %7 : vector<1x18x128xf32> to vector<18x128xf32>
    %c1_9 = arith.constant 1 : index
    %c0_10 = arith.constant 0 : index
    %c0_11 = arith.constant 0 : index
    %9 = vector.load %arg1[%c1_9, %c0_10, %c0_11] : memref<9x18x128xf32, #tpu.memory_space<vmem>>, vector<1x18x128xf32>
    %10 = vector.shape_cast %9 : vector<1x18x128xf32> to vector<18x128xf32>
    %11 = arith.mulf %8, %10 : vector<18x128xf32>
    %12 = arith.addf %6, %11 : vector<18x128xf32>
    %c2 = arith.constant 2 : index
    %c0_12 = arith.constant 0 : index
    %c0_13 = arith.constant 0 : index
    %13 = vector.load %arg0[%c2, %c0_12, %c0_13] : memref<9x18x128xf32, #tpu.memory_space<vmem>>, vector<1x18x128xf32>
    %14 = vector.shape_cast %13 : vector<1x18x128xf32> to vector<18x128xf32>
    %c2_14 = arith.constant 2 : index
    %c0_15 = arith.constant 0 : index
    %c0_16 = arith.constant 0 : index
    %15 = vector.load %arg1[%c2_14, %c0_15, %c0_16] : memref<9x18x128xf32, #tpu.memory_space<vmem>>, vector<1x18x128xf32>
    %16 = vector.shape_cast %15 : vector<1x18x128xf32> to vector<18x128xf32>
    %17 = arith.mulf %14, %16 : vector<18x128xf32>
    %18 = arith.addf %12, %17 : vector<18x128xf32>
    %c3 = arith.constant 3 : index
    %c0_17 = arith.constant 0 : index
    %c0_18 = arith.constant 0 : index
    %19 = vector.load %arg0[%c3, %c0_17, %c0_18] : memref<9x18x128xf32, #tpu.memory_space<vmem>>, vector<1x18x128xf32>
    %20 = vector.shape_cast %19 : vector<1x18x128xf32> to vector<18x128xf32>
    %c3_19 = arith.constant 3 : index
    %c0_20 = arith.constant 0 : index
    %c0_21 = arith.constant 0 : index
    %21 = vector.load %arg1[%c3_19, %c0_20, %c0_21] : memref<9x18x128xf32, #tpu.memory_space<vmem>>, vector<1x18x128xf32>
    %22 = vector.shape_cast %21 : vector<1x18x128xf32> to vector<18x128xf32>
    %23 = arith.mulf %20, %22 : vector<18x128xf32>
    %24 = arith.addf %18, %23 : vector<18x128xf32>
    %c4 = arith.constant 4 : index
    %c0_22 = arith.constant 0 : index
    %c0_23 = arith.constant 0 : index
    %25 = vector.load %arg0[%c4, %c0_22, %c0_23] : memref<9x18x128xf32, #tpu.memory_space<vmem>>, vector<1x18x128xf32>
    %26 = vector.shape_cast %25 : vector<1x18x128xf32> to vector<18x128xf32>
    %c4_24 = arith.constant 4 : index
    %c0_25 = arith.constant 0 : index
    %c0_26 = arith.constant 0 : index
    %27 = vector.load %arg1[%c4_24, %c0_25, %c0_26] : memref<9x18x128xf32, #tpu.memory_space<vmem>>, vector<1x18x128xf32>
    %28 = vector.shape_cast %27 : vector<1x18x128xf32> to vector<18x128xf32>
    %29 = arith.mulf %26, %28 : vector<18x128xf32>
    %30 = arith.addf %24, %29 : vector<18x128xf32>
    %c5 = arith.constant 5 : index
    %c0_27 = arith.constant 0 : index
    %c0_28 = arith.constant 0 : index
    %31 = vector.load %arg0[%c5, %c0_27, %c0_28] : memref<9x18x128xf32, #tpu.memory_space<vmem>>, vector<1x18x128xf32>
    %32 = vector.shape_cast %31 : vector<1x18x128xf32> to vector<18x128xf32>
    %c5_29 = arith.constant 5 : index
    %c0_30 = arith.constant 0 : index
    %c0_31 = arith.constant 0 : index
    %33 = vector.load %arg1[%c5_29, %c0_30, %c0_31] : memref<9x18x128xf32, #tpu.memory_space<vmem>>, vector<1x18x128xf32>
    %34 = vector.shape_cast %33 : vector<1x18x128xf32> to vector<18x128xf32>
    %35 = arith.mulf %32, %34 : vector<18x128xf32>
    %36 = arith.addf %30, %35 : vector<18x128xf32>
    %c6 = arith.constant 6 : index
    %c0_32 = arith.constant 0 : index
    %c0_33 = arith.constant 0 : index
    %37 = vector.load %arg0[%c6, %c0_32, %c0_33] : memref<9x18x128xf32, #tpu.memory_space<vmem>>, vector<1x18x128xf32>
    %38 = vector.shape_cast %37 : vector<1x18x128xf32> to vector<18x128xf32>
    %c6_34 = arith.constant 6 : index
    %c0_35 = arith.constant 0 : index
    %c0_36 = arith.constant 0 : index
    %39 = vector.load %arg1[%c6_34, %c0_35, %c0_36] : memref<9x18x128xf32, #tpu.memory_space<vmem>>, vector<1x18x128xf32>
    %40 = vector.shape_cast %39 : vector<1x18x128xf32> to vector<18x128xf32>
    %41 = arith.mulf %38, %40 : vector<18x128xf32>
    %42 = arith.addf %36, %41 : vector<18x128xf32>
    %c7 = arith.constant 7 : index
    %c0_37 = arith.constant 0 : index
    %c0_38 = arith.constant 0 : index
    %43 = vector.load %arg0[%c7, %c0_37, %c0_38] : memref<9x18x128xf32, #tpu.memory_space<vmem>>, vector<1x18x128xf32>
    %44 = vector.shape_cast %43 : vector<1x18x128xf32> to vector<18x128xf32>
    %c7_39 = arith.constant 7 : index
    %c0_40 = arith.constant 0 : index
    %c0_41 = arith.constant 0 : index
    %45 = vector.load %arg1[%c7_39, %c0_40, %c0_41] : memref<9x18x128xf32, #tpu.memory_space<vmem>>, vector<1x18x128xf32>
    %46 = vector.shape_cast %45 : vector<1x18x128xf32> to vector<18x128xf32>
    %47 = arith.mulf %44, %46 : vector<18x128xf32>
    %48 = arith.addf %42, %47 : vector<18x128xf32>
    %c8 = arith.constant 8 : index
    %c0_42 = arith.constant 0 : index
    %c0_43 = arith.constant 0 : index
    %49 = vector.load %arg0[%c8, %c0_42, %c0_43] : memref<9x18x128xf32, #tpu.memory_space<vmem>>, vector<1x18x128xf32>
    %50 = vector.shape_cast %49 : vector<1x18x128xf32> to vector<18x128xf32>
    %c8_44 = arith.constant 8 : index
    %c0_45 = arith.constant 0 : index
    %c0_46 = arith.constant 0 : index
    %51 = vector.load %arg1[%c8_44, %c0_45, %c0_46] : memref<9x18x128xf32, #tpu.memory_space<vmem>>, vector<1x18x128xf32>
    %52 = vector.shape_cast %51 : vector<1x18x128xf32> to vector<18x128xf32>
    %53 = arith.mulf %50, %52 : vector<18x128xf32>
    %54 = arith.addf %48, %53 : vector<18x128xf32>
    %cst = arith.constant 0.000000e+00 : f32
    %cst_47 = arith.constant 6.000000e+00 : f32
    %55 = vector.broadcast %cst : f32 to vector<18x128xf32>
    %56 = arith.maximumf %55, %54 : vector<18x128xf32>
    %57 = vector.broadcast %cst_47 : f32 to vector<18x128xf32>
    %58 = arith.minimumf %57, %56 : vector<18x128xf32>
    %c0_48 = arith.constant 0 : index
    %c0_49 = arith.constant 0 : index
    %59 = vector.load %arg4[%c0_48, %c0_49] : memref<16x128xf32, #tpu.memory_space<vmem>>, vector<16x128xf32>
    %c0_50 = arith.constant 0 : index
    %c0_51 = arith.constant 0 : index
    %c0_52 = arith.constant 0 : index
    %60 = vector.load %arg3[%c0_50, %c0_51, %c0_52] : memref<18x16x128xf32, #tpu.memory_space<vmem>>, vector<1x16x128xf32>
    %61 = vector.shape_cast %60 : vector<1x16x128xf32> to vector<16x128xf32>
    %62 = vector.extract_strided_slice %58 {offsets = [0, 0], sizes = [1, 128], strides = [1, 1]} : vector<18x128xf32> to vector<1x128xf32>
    %63 = vector.shape_cast %62 : vector<1x128xf32> to vector<1x128xf32>
    %64 = vector.broadcast %63 : vector<1x128xf32> to vector<16x128xf32>
    %65 = arith.mulf %61, %64 : vector<16x128xf32>
    %66 = arith.addf %59, %65 : vector<16x128xf32>
    %c1_53 = arith.constant 1 : index
    %c0_54 = arith.constant 0 : index
    %c0_55 = arith.constant 0 : index
    %67 = vector.load %arg3[%c1_53, %c0_54, %c0_55] : memref<18x16x128xf32, #tpu.memory_space<vmem>>, vector<1x16x128xf32>
    %68 = vector.shape_cast %67 : vector<1x16x128xf32> to vector<16x128xf32>
    %69 = vector.extract_strided_slice %58 {offsets = [1, 0], sizes = [1, 128], strides = [1, 1]} : vector<18x128xf32> to vector<1x128xf32>
    %70 = vector.shape_cast %69 : vector<1x128xf32> to vector<1x128xf32>
    %71 = vector.broadcast %70 : vector<1x128xf32> to vector<16x128xf32>
    %72 = arith.mulf %68, %71 : vector<16x128xf32>
    %73 = arith.addf %66, %72 : vector<16x128xf32>
    %c2_56 = arith.constant 2 : index
    %c0_57 = arith.constant 0 : index
    %c0_58 = arith.constant 0 : index
    %74 = vector.load %arg3[%c2_56, %c0_57, %c0_58] : memref<18x16x128xf32, #tpu.memory_space<vmem>>, vector<1x16x128xf32>
    %75 = vector.shape_cast %74 : vector<1x16x128xf32> to vector<16x128xf32>
    %76 = vector.extract_strided_slice %58 {offsets = [2, 0], sizes = [1, 128], strides = [1, 1]} : vector<18x128xf32> to vector<1x128xf32>
    %77 = vector.shape_cast %76 : vector<1x128xf32> to vector<1x128xf32>
    %78 = vector.broadcast %77 : vector<1x128xf32> to vector<16x128xf32>
    %79 = arith.mulf %75, %78 : vector<16x128xf32>
    %80 = arith.addf %73, %79 : vector<16x128xf32>
    %c3_59 = arith.constant 3 : index
    %c0_60 = arith.constant 0 : index
    %c0_61 = arith.constant 0 : index
    %81 = vector.load %arg3[%c3_59, %c0_60, %c0_61] : memref<18x16x128xf32, #tpu.memory_space<vmem>>, vector<1x16x128xf32>
    %82 = vector.shape_cast %81 : vector<1x16x128xf32> to vector<16x128xf32>
    %83 = vector.extract_strided_slice %58 {offsets = [3, 0], sizes = [1, 128], strides = [1, 1]} : vector<18x128xf32> to vector<1x128xf32>
    %84 = vector.shape_cast %83 : vector<1x128xf32> to vector<1x128xf32>
    %85 = vector.broadcast %84 : vector<1x128xf32> to vector<16x128xf32>
    %86 = arith.mulf %82, %85 : vector<16x128xf32>
    %87 = arith.addf %80, %86 : vector<16x128xf32>
    %c4_62 = arith.constant 4 : index
    %c0_63 = arith.constant 0 : index
    %c0_64 = arith.constant 0 : index
    %88 = vector.load %arg3[%c4_62, %c0_63, %c0_64] : memref<18x16x128xf32, #tpu.memory_space<vmem>>, vector<1x16x128xf32>
    %89 = vector.shape_cast %88 : vector<1x16x128xf32> to vector<16x128xf32>
    %90 = vector.extract_strided_slice %58 {offsets = [4, 0], sizes = [1, 128], strides = [1, 1]} : vector<18x128xf32> to vector<1x128xf32>
    %91 = vector.shape_cast %90 : vector<1x128xf32> to vector<1x128xf32>
    %92 = vector.broadcast %91 : vector<1x128xf32> to vector<16x128xf32>
    %93 = arith.mulf %89, %92 : vector<16x128xf32>
    %94 = arith.addf %87, %93 : vector<16x128xf32>
    %c5_65 = arith.constant 5 : index
    %c0_66 = arith.constant 0 : index
    %c0_67 = arith.constant 0 : index
    %95 = vector.load %arg3[%c5_65, %c0_66, %c0_67] : memref<18x16x128xf32, #tpu.memory_space<vmem>>, vector<1x16x128xf32>
    %96 = vector.shape_cast %95 : vector<1x16x128xf32> to vector<16x128xf32>
    %97 = vector.extract_strided_slice %58 {offsets = [5, 0], sizes = [1, 128], strides = [1, 1]} : vector<18x128xf32> to vector<1x128xf32>
    %98 = vector.shape_cast %97 : vector<1x128xf32> to vector<1x128xf32>
    %99 = vector.broadcast %98 : vector<1x128xf32> to vector<16x128xf32>
    %100 = arith.mulf %96, %99 : vector<16x128xf32>
    %101 = arith.addf %94, %100 : vector<16x128xf32>
    %c6_68 = arith.constant 6 : index
    %c0_69 = arith.constant 0 : index
    %c0_70 = arith.constant 0 : index
    %102 = vector.load %arg3[%c6_68, %c0_69, %c0_70] : memref<18x16x128xf32, #tpu.memory_space<vmem>>, vector<1x16x128xf32>
    %103 = vector.shape_cast %102 : vector<1x16x128xf32> to vector<16x128xf32>
    %104 = vector.extract_strided_slice %58 {offsets = [6, 0], sizes = [1, 128], strides = [1, 1]} : vector<18x128xf32> to vector<1x128xf32>
    %105 = vector.shape_cast %104 : vector<1x128xf32> to vector<1x128xf32>
    %106 = vector.broadcast %105 : vector<1x128xf32> to vector<16x128xf32>
    %107 = arith.mulf %103, %106 : vector<16x128xf32>
    %108 = arith.addf %101, %107 : vector<16x128xf32>
    %c7_71 = arith.constant 7 : index
    %c0_72 = arith.constant 0 : index
    %c0_73 = arith.constant 0 : index
    %109 = vector.load %arg3[%c7_71, %c0_72, %c0_73] : memref<18x16x128xf32, #tpu.memory_space<vmem>>, vector<1x16x128xf32>
    %110 = vector.shape_cast %109 : vector<1x16x128xf32> to vector<16x128xf32>
    %111 = vector.extract_strided_slice %58 {offsets = [7, 0], sizes = [1, 128], strides = [1, 1]} : vector<18x128xf32> to vector<1x128xf32>
    %112 = vector.shape_cast %111 : vector<1x128xf32> to vector<1x128xf32>
    %113 = vector.broadcast %112 : vector<1x128xf32> to vector<16x128xf32>
    %114 = arith.mulf %110, %113 : vector<16x128xf32>
    %115 = arith.addf %108, %114 : vector<16x128xf32>
    %c8_74 = arith.constant 8 : index
    %c0_75 = arith.constant 0 : index
    %c0_76 = arith.constant 0 : index
    %116 = vector.load %arg3[%c8_74, %c0_75, %c0_76] : memref<18x16x128xf32, #tpu.memory_space<vmem>>, vector<1x16x128xf32>
    %117 = vector.shape_cast %116 : vector<1x16x128xf32> to vector<16x128xf32>
    %118 = vector.extract_strided_slice %58 {offsets = [8, 0], sizes = [1, 128], strides = [1, 1]} : vector<18x128xf32> to vector<1x128xf32>
    %119 = vector.shape_cast %118 : vector<1x128xf32> to vector<1x128xf32>
    %120 = vector.broadcast %119 : vector<1x128xf32> to vector<16x128xf32>
    %121 = arith.mulf %117, %120 : vector<16x128xf32>
    %122 = arith.addf %115, %121 : vector<16x128xf32>
    %c9 = arith.constant 9 : index
    %c0_77 = arith.constant 0 : index
    %c0_78 = arith.constant 0 : index
    %123 = vector.load %arg3[%c9, %c0_77, %c0_78] : memref<18x16x128xf32, #tpu.memory_space<vmem>>, vector<1x16x128xf32>
    %124 = vector.shape_cast %123 : vector<1x16x128xf32> to vector<16x128xf32>
    %125 = vector.extract_strided_slice %58 {offsets = [9, 0], sizes = [1, 128], strides = [1, 1]} : vector<18x128xf32> to vector<1x128xf32>
    %126 = vector.shape_cast %125 : vector<1x128xf32> to vector<1x128xf32>
    %127 = vector.broadcast %126 : vector<1x128xf32> to vector<16x128xf32>
    %128 = arith.mulf %124, %127 : vector<16x128xf32>
    %129 = arith.addf %122, %128 : vector<16x128xf32>
    %c10 = arith.constant 10 : index
    %c0_79 = arith.constant 0 : index
    %c0_80 = arith.constant 0 : index
    %130 = vector.load %arg3[%c10, %c0_79, %c0_80] : memref<18x16x128xf32, #tpu.memory_space<vmem>>, vector<1x16x128xf32>
    %131 = vector.shape_cast %130 : vector<1x16x128xf32> to vector<16x128xf32>
    %132 = vector.extract_strided_slice %58 {offsets = [10, 0], sizes = [1, 128], strides = [1, 1]} : vector<18x128xf32> to vector<1x128xf32>
    %133 = vector.shape_cast %132 : vector<1x128xf32> to vector<1x128xf32>
    %134 = vector.broadcast %133 : vector<1x128xf32> to vector<16x128xf32>
    %135 = arith.mulf %131, %134 : vector<16x128xf32>
    %136 = arith.addf %129, %135 : vector<16x128xf32>
    %c11 = arith.constant 11 : index
    %c0_81 = arith.constant 0 : index
    %c0_82 = arith.constant 0 : index
    %137 = vector.load %arg3[%c11, %c0_81, %c0_82] : memref<18x16x128xf32, #tpu.memory_space<vmem>>, vector<1x16x128xf32>
    %138 = vector.shape_cast %137 : vector<1x16x128xf32> to vector<16x128xf32>
    %139 = vector.extract_strided_slice %58 {offsets = [11, 0], sizes = [1, 128], strides = [1, 1]} : vector<18x128xf32> to vector<1x128xf32>
    %140 = vector.shape_cast %139 : vector<1x128xf32> to vector<1x128xf32>
    %141 = vector.broadcast %140 : vector<1x128xf32> to vector<16x128xf32>
    %142 = arith.mulf %138, %141 : vector<16x128xf32>
    %143 = arith.addf %136, %142 : vector<16x128xf32>
    %c12 = arith.constant 12 : index
    %c0_83 = arith.constant 0 : index
    %c0_84 = arith.constant 0 : index
    %144 = vector.load %arg3[%c12, %c0_83, %c0_84] : memref<18x16x128xf32, #tpu.memory_space<vmem>>, vector<1x16x128xf32>
    %145 = vector.shape_cast %144 : vector<1x16x128xf32> to vector<16x128xf32>
    %146 = vector.extract_strided_slice %58 {offsets = [12, 0], sizes = [1, 128], strides = [1, 1]} : vector<18x128xf32> to vector<1x128xf32>
    %147 = vector.shape_cast %146 : vector<1x128xf32> to vector<1x128xf32>
    %148 = vector.broadcast %147 : vector<1x128xf32> to vector<16x128xf32>
    %149 = arith.mulf %145, %148 : vector<16x128xf32>
    %150 = arith.addf %143, %149 : vector<16x128xf32>
    %c13 = arith.constant 13 : index
    %c0_85 = arith.constant 0 : index
    %c0_86 = arith.constant 0 : index
    %151 = vector.load %arg3[%c13, %c0_85, %c0_86] : memref<18x16x128xf32, #tpu.memory_space<vmem>>, vector<1x16x128xf32>
    %152 = vector.shape_cast %151 : vector<1x16x128xf32> to vector<16x128xf32>
    %153 = vector.extract_strided_slice %58 {offsets = [13, 0], sizes = [1, 128], strides = [1, 1]} : vector<18x128xf32> to vector<1x128xf32>
    %154 = vector.shape_cast %153 : vector<1x128xf32> to vector<1x128xf32>
    %155 = vector.broadcast %154 : vector<1x128xf32> to vector<16x128xf32>
    %156 = arith.mulf %152, %155 : vector<16x128xf32>
    %157 = arith.addf %150, %156 : vector<16x128xf32>
    %c14 = arith.constant 14 : index
    %c0_87 = arith.constant 0 : index
    %c0_88 = arith.constant 0 : index
    %158 = vector.load %arg3[%c14, %c0_87, %c0_88] : memref<18x16x128xf32, #tpu.memory_space<vmem>>, vector<1x16x128xf32>
    %159 = vector.shape_cast %158 : vector<1x16x128xf32> to vector<16x128xf32>
    %160 = vector.extract_strided_slice %58 {offsets = [14, 0], sizes = [1, 128], strides = [1, 1]} : vector<18x128xf32> to vector<1x128xf32>
    %161 = vector.shape_cast %160 : vector<1x128xf32> to vector<1x128xf32>
    %162 = vector.broadcast %161 : vector<1x128xf32> to vector<16x128xf32>
    %163 = arith.mulf %159, %162 : vector<16x128xf32>
    %164 = arith.addf %157, %163 : vector<16x128xf32>
    %c15 = arith.constant 15 : index
    %c0_89 = arith.constant 0 : index
    %c0_90 = arith.constant 0 : index
    %165 = vector.load %arg3[%c15, %c0_89, %c0_90] : memref<18x16x128xf32, #tpu.memory_space<vmem>>, vector<1x16x128xf32>
    %166 = vector.shape_cast %165 : vector<1x16x128xf32> to vector<16x128xf32>
    %167 = vector.extract_strided_slice %58 {offsets = [15, 0], sizes = [1, 128], strides = [1, 1]} : vector<18x128xf32> to vector<1x128xf32>
    %168 = vector.shape_cast %167 : vector<1x128xf32> to vector<1x128xf32>
    %169 = vector.broadcast %168 : vector<1x128xf32> to vector<16x128xf32>
    %170 = arith.mulf %166, %169 : vector<16x128xf32>
    %171 = arith.addf %164, %170 : vector<16x128xf32>
    %c16 = arith.constant 16 : index
    %c0_91 = arith.constant 0 : index
    %c0_92 = arith.constant 0 : index
    %172 = vector.load %arg3[%c16, %c0_91, %c0_92] : memref<18x16x128xf32, #tpu.memory_space<vmem>>, vector<1x16x128xf32>
    %173 = vector.shape_cast %172 : vector<1x16x128xf32> to vector<16x128xf32>
    %174 = vector.extract_strided_slice %58 {offsets = [16, 0], sizes = [1, 128], strides = [1, 1]} : vector<18x128xf32> to vector<1x128xf32>
    %175 = vector.shape_cast %174 : vector<1x128xf32> to vector<1x128xf32>
    %176 = vector.broadcast %175 : vector<1x128xf32> to vector<16x128xf32>
    %177 = arith.mulf %173, %176 : vector<16x128xf32>
    %178 = arith.addf %171, %177 : vector<16x128xf32>
    %c17 = arith.constant 17 : index
    %c0_93 = arith.constant 0 : index
    %c0_94 = arith.constant 0 : index
    %179 = vector.load %arg3[%c17, %c0_93, %c0_94] : memref<18x16x128xf32, #tpu.memory_space<vmem>>, vector<1x16x128xf32>
    %180 = vector.shape_cast %179 : vector<1x16x128xf32> to vector<16x128xf32>
    %181 = vector.extract_strided_slice %58 {offsets = [17, 0], sizes = [1, 128], strides = [1, 1]} : vector<18x128xf32> to vector<1x128xf32>
    %182 = vector.shape_cast %181 : vector<1x128xf32> to vector<1x128xf32>
    %183 = vector.broadcast %182 : vector<1x128xf32> to vector<16x128xf32>
    %184 = arith.mulf %180, %183 : vector<16x128xf32>
    %185 = arith.addf %178, %184 : vector<16x128xf32>
    %c0_95 = arith.constant 0 : index
    %c0_96 = arith.constant 0 : index
    %186 = vector.load %arg5[%c0_95, %c0_96] : memref<16x128xf32, #tpu.memory_space<vmem>>, vector<16x128xf32>
    tpu.vector_store %arg5[%c0_95, %c0_96], %185 {strides = array<i32>} : memref<16x128xf32, #tpu.memory_space<vmem>>, vector<16x128xf32>,
    return
  }
}

</mosaic_0001>

<llo_original>
// kernel: tpu_custom_call.1
$region0: #{tpu_custom_call.1}
  #allocation0 [shape = 'u32[]', space=smem, size = 0x4, offset = 0x4, fixed_abs, tag = 'smem constant byte address 0x4 - core index']
  #allocation1 [shape = 'u32[144,128]{1,0:T(1,128)}', space=vmem, size = 0x12000, scoped, tag = 'internal scratch']
  %s0 = inlined_call_operand.hbm [shape: f32[9,18,128], index: 0, kind: input, shape index: {}]
  %s1 = inlined_call_operand.hbm [shape: f32[9,18,128], index: 1, kind: input, shape index: {}]
  %s2 = inlined_call_operand.hbm [shape: f32[18,128], index: 2, kind: input, shape index: {}]
  %s3 = inlined_call_operand.hbm [shape: f32[18,16,128], index: 3, kind: input, shape index: {}]
  %s4 = inlined_call_operand.hbm [shape: f32[16,128], index: 4, kind: input, shape index: {}]
  %s5 = inlined_call_operand.hbm [shape: f32[16,128], index: 5, kind: output, shape index: {}]
  %s6 = sld [smem:[#allocation0]]
  $region50: #{tpu_custom_call.1} parent=0
    _
  %s8 = ssub.s32 1, %s6
  %s9 = scalar_select 0, %s8, %s6
  $region1: #{tpu_custom_call.1} parent=0
    #allocation2 [shape = 'u8[110592]{0}', space=vmem, size = 0x1b000, scoped, tag = 'input window, operand 0, single buffered']
    #allocation3 [shape = 's32[1]{0}', space=sflag, size = 0x4, scoped, tag = 'scoped memory for tpu_custom_call.1']
    #allocation4 [shape = 's32[1]{0}', space=sflag, size = 0x4, scoped, tag = 'scoped memory for tpu_custom_call.1']
    #allocation5 [shape = 'u8[110592]{0}', space=vmem, size = 0x1b000, scoped, tag = 'input window, operand 1, single buffered']
    #allocation6 [shape = 's32[1]{0}', space=sflag, size = 0x4, scoped, tag = 'scoped memory for tpu_custom_call.1']
    #allocation7 [shape = 'u8[12288]{0}', space=vmem, size = 0x3000, scoped, tag = 'input window, operand 2, single buffered']
    #allocation8 [shape = 'u8[147456]{0}', space=vmem, size = 0x24000, scoped, tag = 'input window, operand 3, single buffered']
    #allocation9 [shape = 's32[1]{0}', space=sflag, size = 0x4, scoped, tag = 'scoped memory for tpu_custom_call.1']
    #allocation10 [shape = 'u8[8192]{0}', space=vmem, size = 0x2000, scoped, tag = 'input window, operand 4, single buffered']
    #allocation11 [shape = 'u8[8192]{0}', space=vmem, size = 0x2000, scoped, tag = 'output window, operand 0, single buffered']
    %10 = vsyncpa [#allocation3], 0
    %11 = vsyncpa [#allocation6], 0
    %12 = vsyncpa [#allocation9], 0
    %13 = vsyncpa [#allocation4], 0
    // Predicated region
    $region2: #{tpu_custom_call.1} parent=1 // pred_check
      _
    $region3: #{tpu_custom_call.1} parent=1 // pred_check_branch
      %15 = sbr.rel (0) target = $region5
    $region4: #{tpu_custom_call.1} parent=1 // pred_region
      %s17 = ssub.s32 3456, 3456
      %18 = vsyncadd [#allocation3], %s17
      %s19 = sshll.u32 [#allocation2], 4
      %s20 = int_to_ptr.vmem [resolvable:$true] %s19
      %25 = dma.hbm_to_vmem [thread:$0]  %s0, 3456, %s20, [#allocation3], 128, 128, 8
    $region5: #{tpu_custom_call.1} parent=1 // pred_fallthru
      _
    // Predicated region
    $region6: #{tpu_custom_call.1} parent=1 // pred_check
      _
    $region7: #{tpu_custom_call.1} parent=1 // pred_check_branch
      %27 = sbr.rel (0) target = $region9
    $region8: #{tpu_custom_call.1} parent=1 // pred_region
      %s29 = ssub.s32 3456, 3456
      %30 = vsyncadd [#allocation6], %s29
      %s31 = sshll.u32 [#allocation5], 4
      %s32 = int_to_ptr.vmem [resolvable:$true] %s31
      %37 = dma.hbm_to_vmem [thread:$0]  %s1, 3456, %s32, [#allocation6], 128, 128, 8
    $region9: #{tpu_custom_call.1} parent=1 // pred_fallthru
      _
    // Predicated region
    $region10: #{tpu_custom_call.1} parent=1 // pred_check
      _
    $region11: #{tpu_custom_call.1} parent=1 // pred_check_branch
      %39 = sbr.rel (0) target = $region13
    $region12: #{tpu_custom_call.1} parent=1 // pred_region
      %s41 = ssub.s32 384, 384
      %42 = vsyncadd [#allocation6], %s41
      %s43 = sshll.u32 [#allocation7], 4
      %s44 = int_to_ptr.vmem [resolvable:$true] %s43
      %49 = dma.hbm_to_vmem [thread:$0]  %s2, 384, %s44, [#allocation6], 128, 128, 8
    $region13: #{tpu_custom_call.1} parent=1 // pred_fallthru
      _
    // Predicated region
    $region14: #{tpu_custom_call.1} parent=1 // pred_check
      _
    $region15: #{tpu_custom_call.1} parent=1 // pred_check_branch
      %51 = sbr.rel (0) target = $region17
    $region16: #{tpu_custom_call.1} parent=1 // pred_region
      %s53 = ssub.s32 4608, 4608
      %54 = vsyncadd [#allocation9], %s53
      %s55 = sshll.u32 [#allocation8], 4
      %s56 = int_to_ptr.vmem [resolvable:$true] %s55
      %61 = dma.hbm_to_vmem [thread:$0]  %s3, 4608, %s56, [#allocation9], 128, 128, 8
    $region17: #{tpu_custom_call.1} parent=1 // pred_fallthru
      _
    // Predicated region
    $region18: #{tpu_custom_call.1} parent=1 // pred_check
      _
    $region19: #{tpu_custom_call.1} parent=1 // pred_check_branch
      %63 = sbr.rel (0) target = $region21
    $region20: #{tpu_custom_call.1} parent=1 // pred_region
      %s65 = ssub.s32 256, 256
      %66 = vsyncadd [#allocation9], %s65
      %s67 = sshll.u32 [#allocation10], 4
      %s68 = int_to_ptr.vmem [resolvable:$true] %s67
      %73 = dma.hbm_to_vmem [thread:$0]  %s4, 256, %s68, [#allocation9], 128, 128, 8
    $region21: #{tpu_custom_call.1} parent=1 // pred_fallthru
      _
    // Predicated region
    $region22: #{tpu_custom_call.1} parent=1 // pred_check
      _
    $region23: #{tpu_custom_call.1} parent=1 // pred_check_branch
      %75 = sbr.rel (0) target = $region25
    $region24: #{tpu_custom_call.1} parent=1 // pred_region
      %76 = dma.done [#allocation3], 3456
    $region25: #{tpu_custom_call.1} parent=1 // pred_fallthru
      _
    // Predicated region
    $region26: #{tpu_custom_call.1} parent=1 // pred_check
      _
    $region27: #{tpu_custom_call.1} parent=1 // pred_check_branch
      %78 = sbr.rel (0) target = $region29
    $region28: #{tpu_custom_call.1} parent=1 // pred_region
      %79 = dma.done [#allocation6], 3456
    $region29: #{tpu_custom_call.1} parent=1 // pred_fallthru
      _
    // Predicated region
    $region30: #{tpu_custom_call.1} parent=1 // pred_check
      _
    $region31: #{tpu_custom_call.1} parent=1 // pred_check_branch
      %81 = sbr.rel (0) target = $region33
    $region32: #{tpu_custom_call.1} parent=1 // pred_region
      %82 = dma.done [#allocation6], 384
    $region33: #{tpu_custom_call.1} parent=1 // pred_fallthru
      _
    // Predicated region
    $region34: #{tpu_custom_call.1} parent=1 // pred_check
      _
    $region35: #{tpu_custom_call.1} parent=1 // pred_check_branch
      %84 = sbr.rel (0) target = $region37
    $region36: #{tpu_custom_call.1} parent=1 // pred_region
      %85 = dma.done [#allocation9], 4608
    $region37: #{tpu_custom_call.1} parent=1 // pred_fallthru
      _
    // Predicated region
    $region38: #{tpu_custom_call.1} parent=1 // pred_check
      _
    $region39: #{tpu_custom_call.1} parent=1 // pred_check_branch
      %87 = sbr.rel (0) target = $region41
    $region40: #{tpu_custom_call.1} parent=1 // pred_region
      %88 = dma.done [#allocation9], 256
    $region41: #{tpu_custom_call.1} parent=1 // pred_fallthru
      _
    %v89 = vld [vmem:[#allocation7] sm:$0xff]
    %v90 = vld [vmem:[#allocation7 + $0x8] sm:$0xff]
    %v91 = vld [vmem:[#allocation7 + $0x10] sm:$0x3]
    %v92 = vld [vmem:[#allocation2] sm:$0xff]
    %v93 = vld [vmem:[#allocation2 + $0x8] sm:$0xff]
    %v94 = vld [vmem:[#allocation2 + $0x10] sm:$0x3]
    %v95 = vld [vmem:[#allocation5] sm:$0xff]
    %v96 = vld [vmem:[#allocation5 + $0x8] sm:$0xff]
    %v97 = vld [vmem:[#allocation5 + $0x10] sm:$0x3]
    %v98 = vmul.f32 %v92, %v95
    %v99 = vmul.f32 %v93, %v96
    %v100 = vmul.f32 %v94, %v97
    %v101 = vadd.f32 %v89, %v98
    %v102 = vadd.f32 %v90, %v99
    %v103 = vadd.f32 %v91, %v100
    %s104 = scalar_lea.vmem [#allocation2], 24
    %v105 = vld [vmem:[%s104] sm:$0xff]
    %v106 = vld [vmem:[%s104 + $0x8] sm:$0xff]
    %v107 = vld [vmem:[%s104 + $0x10] sm:$0x3]
    %s108 = scalar_lea.vmem [#allocation5], 24
    %v109 = vld [vmem:[%s108] sm:$0xff]
    %v110 = vld [vmem:[%s108 + $0x8] sm:$0xff]
    %v111 = vld [vmem:[%s108 + $0x10] sm:$0x3]
    %v112 = vmul.f32 %v105, %v109
    %v113 = vmul.f32 %v106, %v110
    %v114 = vmul.f32 %v107, %v111
    %v115 = vadd.f32 %v101, %v112
    %v116 = vadd.f32 %v102, %v113
    %v117 = vadd.f32 %v103, %v114
    %s118 = scalar_lea.vmem [#allocation2], 48
    %v119 = vld [vmem:[%s118] sm:$0xff]
    %v120 = vld [vmem:[%s118 + $0x8] sm:$0xff]
    %v121 = vld [vmem:[%s118 + $0x10] sm:$0x3]
    %s122 = scalar_lea.vmem [#allocation5], 48
    %v123 = vld [vmem:[%s122] sm:$0xff]
    %v124 = vld [vmem:[%s122 + $0x8] sm:$0xff]
    %v125 = vld [vmem:[%s122 + $0x10] sm:$0x3]
    %v126 = vmul.f32 %v119, %v123
    %v127 = vmul.f32 %v120, %v124
    %v128 = vmul.f32 %v121, %v125
    %v129 = vadd.f32 %v115, %v126
    %v130 = vadd.f32 %v116, %v127
    %v131 = vadd.f32 %v117, %v128
    %s132 = scalar_lea.vmem [#allocation2], 72
    %v133 = vld [vmem:[%s132] sm:$0xff]
    %v134 = vld [vmem:[%s132 + $0x8] sm:$0xff]
    %v135 = vld [vmem:[%s132 + $0x10] sm:$0x3]
    %s136 = scalar_lea.vmem [#allocation5], 72
    %v137 = vld [vmem:[%s136] sm:$0xff]
    %v138 = vld [vmem:[%s136 + $0x8] sm:$0xff]
    %v139 = vld [vmem:[%s136 + $0x10] sm:$0x3]
    %v140 = vmul.f32 %v133, %v137
    %v141 = vmul.f32 %v134, %v138
    %v142 = vmul.f32 %v135, %v139
    %v143 = vadd.f32 %v129, %v140
    %v144 = vadd.f32 %v130, %v141
    %v145 = vadd.f32 %v131, %v142
    %s146 = scalar_lea.vmem [#allocation2], 96
    %v147 = vld [vmem:[%s146] sm:$0xff]
    %v148 = vld [vmem:[%s146 + $0x8] sm:$0xff]
    %v149 = vld [vmem:[%s146 + $0x10] sm:$0x3]
    %s150 = scalar_lea.vmem [#allocation5], 96
    %v151 = vld [vmem:[%s150] sm:$0xff]
    %v152 = vld [vmem:[%s150 + $0x8] sm:$0xff]
    %v153 = vld [vmem:[%s150 + $0x10] sm:$0x3]
    %v154 = vmul.f32 %v147, %v151
    %v155 = vmul.f32 %v148, %v152
    %v156 = vmul.f32 %v149, %v153
    %v157 = vadd.f32 %v143, %v154
    %v158 = vadd.f32 %v144, %v155
    %v159 = vadd.f32 %v145, %v156
    %s160 = scalar_lea.vmem [#allocation2], 120
    %v161 = vld [vmem:[%s160] sm:$0xff]
    %v162 = vld [vmem:[%s160 + $0x8] sm:$0xff]
    %v163 = vld [vmem:[%s160 + $0x10] sm:$0x3]
    %s164 = scalar_lea.vmem [#allocation5], 120
    %v165 = vld [vmem:[%s164] sm:$0xff]
    %v166 = vld [vmem:[%s164 + $0x8] sm:$0xff]
    %v167 = vld [vmem:[%s164 + $0x10] sm:$0x3]
    %v168 = vmul.f32 %v161, %v165
    %v169 = vmul.f32 %v162, %v166
    %v170 = vmul.f32 %v163, %v167
    %v171 = vadd.f32 %v157, %v168
    %v172 = vadd.f32 %v158, %v169
    %v173 = vadd.f32 %v159, %v170
    %s174 = scalar_lea.vmem [#allocation2], 144
    %v175 = vld [vmem:[%s174] sm:$0xff]
    %v176 = vld [vmem:[%s174 + $0x8] sm:$0xff]
    %v177 = vld [vmem:[%s174 + $0x10] sm:$0x3]
    %s178 = scalar_lea.vmem [#allocation5], 144
    %v179 = vld [vmem:[%s178] sm:$0xff]
    %v180 = vld [vmem:[%s178 + $0x8] sm:$0xff]
    %v181 = vld [vmem:[%s178 + $0x10] sm:$0x3]
    %v182 = vmul.f32 %v175, %v179
    %v183 = vmul.f32 %v176, %v180
    %v184 = vmul.f32 %v177, %v181
    %v185 = vadd.f32 %v171, %v182
    %v186 = vadd.f32 %v172, %v183
    %v187 = vadd.f32 %v173, %v184
    %s188 = scalar_lea.vmem [#allocation2], 168
    %v189 = vld [vmem:[%s188] sm:$0xff]
    %v190 = vld [vmem:[%s188 + $0x8] sm:$0xff]
    %v191 = vld [vmem:[%s188 + $0x10] sm:$0x3]
    %s192 = scalar_lea.vmem [#allocation5], 168
    %v193 = vld [vmem:[%s192] sm:$0xff]
    %v194 = vld [vmem:[%s192 + $0x8] sm:$0xff]
    %v195 = vld [vmem:[%s192 + $0x10] sm:$0x3]
    %v196 = vmul.f32 %v189, %v193
    %v197 = vmul.f32 %v190, %v194
    %v198 = vmul.f32 %v191, %v195
    %v199 = vadd.f32 %v185, %v196
    %v200 = vadd.f32 %v186, %v197
    %v201 = vadd.f32 %v187, %v198
    %s202 = scalar_lea.vmem [#allocation2], 192
    %v203 = vld [vmem:[%s202] sm:$0xff]
    %v204 = vld [vmem:[%s202 + $0x8] sm:$0xff]
    %v205 = vld [vmem:[%s202 + $0x10] sm:$0x3]
    %s206 = scalar_lea.vmem [#allocation5], 192
    %v207 = vld [vmem:[%s206] sm:$0xff]
    %v208 = vld [vmem:[%s206 + $0x8] sm:$0xff]
    %v209 = vld [vmem:[%s206 + $0x10] sm:$0x3]
    %v210 = vmul.f32 %v203, %v207
    %v211 = vmul.f32 %v204, %v208
    %v212 = vmul.f32 %v205, %v209
    %v213 = vadd.f32 %v199, %v210
    %v214 = vadd.f32 %v200, %v211
    %v215 = vadd.f32 %v201, %v212
    %v216 = vmax.f32 %v213, 0.0
    %v217 = vmax.f32 %v214, 0.0
    %v218 = vmax.f32 %v215, 0.0
    %v219 = vmin.f32 %v216, 6.0
    %v220 = vmin.f32 %v217, 6.0
    %v221 = vmin.f32 %v218, 6.0
    %v222 = vld [vmem:[#allocation10] sm:$0xff]
    %v223 = vld [vmem:[#allocation10 + $0x8] sm:$0xff]
    %v224 = vld [vmem:[#allocation8] sm:$0xff]
    %v225 = vld [vmem:[#allocation8 + $0x8] sm:$0xff]
    %v226 = vlaneseq
    %v227 = vshrl.u32 %v226, 7
    %v228 = vsub.s32 0, %v227
    %v229 = vrot.slane %v219, %v228
    %v230 = vmul.f32 %v224, %v229
    %v231 = vmul.f32 %v225, %v229
    %v232 = vadd.f32 %v222, %v230
    %v233 = vadd.f32 %v223, %v231
    %s234 = scalar_lea.vmem [#allocation8], 16
    %v235 = vld [vmem:[%s234] sm:$0xff]
    %v236 = vld [vmem:[%s234 + $0x8] sm:$0xff]
    %v237 = vlaneseq
    %v238 = vshrl.u32 %v237, 7
    %v239 = vsub.s32 1, %v238
    %v240 = vrot.slane %v219, %v239
    %v241 = vmul.f32 %v235, %v240
    %v242 = vmul.f32 %v236, %v240
    %v243 = vadd.f32 %v232, %v241
    %v244 = vadd.f32 %v233, %v242
    %s245 = scalar_lea.vmem [#allocation8], 32
    %v246 = vld [vmem:[%s245] sm:$0xff]
    %v247 = vld [vmem:[%s245 + $0x8] sm:$0xff]
    %v248 = vlaneseq
    %v249 = vshrl.u32 %v248, 7
    %v250 = vsub.s32 2, %v249
    %v251 = vrot.slane %v219, %v250
    %v252 = vmul.f32 %v246, %v251
    %v253 = vmul.f32 %v247, %v251
    %v254 = vadd.f32 %v243, %v252
    %v255 = vadd.f32 %v244, %v253
    %s256 = scalar_lea.vmem [#allocation8], 48
    %v257 = vld [vmem:[%s256] sm:$0xff]
    %v258 = vld [vmem:[%s256 + $0x8] sm:$0xff]
    %v259 = vlaneseq
    %v260 = vshrl.u32 %v259, 7
    %v261 = vsub.s32 3, %v260
    %v262 = vrot.slane %v219, %v261
    %v263 = vmul.f32 %v257, %v262
    %v264 = vmul.f32 %v258, %v262
    %v265 = vadd.f32 %v254, %v263
    %v266 = vadd.f32 %v255, %v264
    %s267 = scalar_lea.vmem [#allocation8], 64
    %v268 = vld [vmem:[%s267] sm:$0xff]
    %v269 = vld [vmem:[%s267 + $0x8] sm:$0xff]
    %v270 = vlaneseq
    %v271 = vshrl.u32 %v270, 7
    %v272 = vsub.s32 4, %v271
    %v273 = vrot.slane %v219, %v272
    %v274 = vmul.f32 %v268, %v273
    %v275 = vmul.f32 %v269, %v273
    %v276 = vadd.f32 %v265, %v274
    %v277 = vadd.f32 %v266, %v275
    %s278 = scalar_lea.vmem [#allocation8], 80
    %v279 = vld [vmem:[%s278] sm:$0xff]
    %v280 = vld [vmem:[%s278 + $0x8] sm:$0xff]
    %v281 = vlaneseq
    %v282 = vshrl.u32 %v281, 7
    %v283 = vsub.s32 5, %v282
    %v284 = vrot.slane %v219, %v283
    %v285 = vmul.f32 %v279, %v284
    %v286 = vmul.f32 %v280, %v284
    %v287 = vadd.f32 %v276, %v285
    %v288 = vadd.f32 %v277, %v286
    %s289 = scalar_lea.vmem [#allocation8], 96
    %v290 = vld [vmem:[%s289] sm:$0xff]
    %v291 = vld [vmem:[%s289 + $0x8] sm:$0xff]
    %v292 = vlaneseq
    %v293 = vshrl.u32 %v292, 7
    %v294 = vsub.s32 6, %v293
    %v295 = vrot.slane %v219, %v294
    %v296 = vmul.f32 %v290, %v295
    %v297 = vmul.f32 %v291, %v295
    %v298 = vadd.f32 %v287, %v296
    %v299 = vadd.f32 %v288, %v297
    %s300 = scalar_lea.vmem [#allocation8], 112
    %v301 = vld [vmem:[%s300] sm:$0xff]
    %v302 = vld [vmem:[%s300 + $0x8] sm:$0xff]
    %v303 = vlaneseq
    %v304 = vshrl.u32 %v303, 7
    %v305 = vsub.s32 7, %v304
    %v306 = vrot.slane %v219, %v305
    %v307 = vmul.f32 %v301, %v306
    %v308 = vmul.f32 %v302, %v306
    %v309 = vadd.f32 %v298, %v307
    %v310 = vadd.f32 %v299, %v308
    %s311 = scalar_lea.vmem [#allocation8], 128
    %v312 = vld [vmem:[%s311] sm:$0xff]
    %v313 = vld [vmem:[%s311 + $0x8] sm:$0xff]
    %v314 = vlaneseq
    %v315 = vshrl.u32 %v314, 7
    %v316 = vsub.s32 0, %v315
    %v317 = vrot.slane %v220, %v316
    %v318 = vmul.f32 %v312, %v317
    %v319 = vmul.f32 %v313, %v317
    %v320 = vadd.f32 %v309, %v318
    %v321 = vadd.f32 %v310, %v319
    %s322 = scalar_lea.vmem [#allocation8], 144
    %v323 = vld [vmem:[%s322] sm:$0xff]
    %v324 = vld [vmem:[%s322 + $0x8] sm:$0xff]
    %v325 = vlaneseq
    %v326 = vshrl.u32 %v325, 7
    %v327 = vsub.s32 1, %v326
    %v328 = vrot.slane %v220, %v327
    %v329 = vmul.f32 %v323, %v328
    %v330 = vmul.f32 %v324, %v328
    %v331 = vadd.f32 %v320, %v329
    %v332 = vadd.f32 %v321, %v330
    %s333 = scalar_lea.vmem [#allocation8], 160
    %v334 = vld [vmem:[%s333] sm:$0xff]
    %v335 = vld [vmem:[%s333 + $0x8] sm:$0xff]
    %v336 = vlaneseq
    %v337 = vshrl.u32 %v336, 7
    %v338 = vsub.s32 2, %v337
    %v339 = vrot.slane %v220, %v338
    %v340 = vmul.f32 %v334, %v339
    %v341 = vmul.f32 %v335, %v339
    %v342 = vadd.f32 %v331, %v340
    %v343 = vadd.f32 %v332, %v341
    %s344 = scalar_lea.vmem [#allocation8], 176
    %v345 = vld [vmem:[%s344] sm:$0xff]
    %v346 = vld [vmem:[%s344 + $0x8] sm:$0xff]
    %v347 = vlaneseq
    %v348 = vshrl.u32 %v347, 7
    %v349 = vsub.s32 3, %v348
    %v350 = vrot.slane %v220, %v349
    %v351 = vmul.f32 %v345, %v350
    %v352 = vmul.f32 %v346, %v350
    %v353 = vadd.f32 %v342, %v351
    %v354 = vadd.f32 %v343, %v352
    %s355 = scalar_lea.vmem [#allocation8], 192
    %v356 = vld [vmem:[%s355] sm:$0xff]
    %v357 = vld [vmem:[%s355 + $0x8] sm:$0xff]
    %v358 = vlaneseq
    %v359 = vshrl.u32 %v358, 7
    %v360 = vsub.s32 4, %v359
    %v361 = vrot.slane %v220, %v360
    %v362 = vmul.f32 %v356, %v361
    %v363 = vmul.f32 %v357, %v361
    %v364 = vadd.f32 %v353, %v362
    %v365 = vadd.f32 %v354, %v363
    %s366 = scalar_lea.vmem [#allocation8], 208
    %v367 = vld [vmem:[%s366] sm:$0xff]
    %v368 = vld [vmem:[%s366 + $0x8] sm:$0xff]
    %v369 = vlaneseq
    %v370 = vshrl.u32 %v369, 7
    %v371 = vsub.s32 5, %v370
    %v372 = vrot.slane %v220, %v371
    %v373 = vmul.f32 %v367, %v372
    %v374 = vmul.f32 %v368, %v372
    %v375 = vadd.f32 %v364, %v373
    %v376 = vadd.f32 %v365, %v374
    %s377 = scalar_lea.vmem [#allocation8], 224
    %v378 = vld [vmem:[%s377] sm:$0xff]
    %v379 = vld [vmem:[%s377 + $0x8] sm:$0xff]
    %v380 = vlaneseq
    %v381 = vshrl.u32 %v380, 7
    %v382 = vsub.s32 6, %v381
    %v383 = vrot.slane %v220, %v382
    %v384 = vmul.f32 %v378, %v383
    %v385 = vmul.f32 %v379, %v383
    %v386 = vadd.f32 %v375, %v384
    %v387 = vadd.f32 %v376, %v385
    %s388 = scalar_lea.vmem [#allocation8], 240
    %v389 = vld [vmem:[%s388] sm:$0xff]
    %v390 = vld [vmem:[%s388 + $0x8] sm:$0xff]
    %v391 = vlaneseq
    %v392 = vshrl.u32 %v391, 7
    %v393 = vsub.s32 7, %v392
    %v394 = vrot.slane %v220, %v393
    %v395 = vmul.f32 %v389, %v394
    %v396 = vmul.f32 %v390, %v394
    %v397 = vadd.f32 %v386, %v395
    %v398 = vadd.f32 %v387, %v396
    %s399 = scalar_lea.vmem [#allocation8], 256
    %v400 = vld [vmem:[%s399] sm:$0xff]
    %v401 = vld [vmem:[%s399 + $0x8] sm:$0xff]
    %v402 = vlaneseq
    %v403 = vshrl.u32 %v402, 7
    %v404 = vsub.s32 0, %v403
    %v405 = vrot.slane %v221, %v404
    %v406 = vmul.f32 %v400, %v405
    %v407 = vmul.f32 %v401, %v405
    %v408 = vadd.f32 %v397, %v406
    %v409 = vadd.f32 %v398, %v407
    %s410 = scalar_lea.vmem [#allocation8], 272
    %v411 = vld [vmem:[%s410] sm:$0xff]
    %v412 = vld [vmem:[%s410 + $0x8] sm:$0xff]
    %v413 = vlaneseq
    %v414 = vshrl.u32 %v413, 7
    %v415 = vsub.s32 1, %v414
    %v416 = vrot.slane %v221, %v415
    %v417 = vmul.f32 %v411, %v416
    %v418 = vmul.f32 %v412, %v416
    %v419 = vadd.f32 %v408, %v417
    %v420 = vadd.f32 %v409, %v418
    %421 = vst [vmem:[#allocation11] sm:$0xff] %v419
    %422 = vst [vmem:[#allocation11 + $0x8] sm:$0xff] %v420
    // Predicated region
    $region42: #{tpu_custom_call.1} parent=1 // pred_check
      _
    $region43: #{tpu_custom_call.1} parent=1 // pred_check_branch
      %424 = sbr.rel (0) target = $region45
    $region44: #{tpu_custom_call.1} parent=1 // pred_region
      %s426 = ssub.s32 256, 256
      %427 = vsyncadd [#allocation4], %s426
      %s428 = sshll.u32 [#allocation11], 4
      %s429 = int_to_ptr.vmem [resolvable:$true] %s428
      %434 = dma.vmem_to_hbm [thread:$0]  %s429, 256, %s5, [#allocation4], 128, 128, 8
    $region45: #{tpu_custom_call.1} parent=1 // pred_fallthru
      _
    // Predicated region
    $region46: #{tpu_custom_call.1} parent=1 // pred_check
      _
    $region47: #{tpu_custom_call.1} parent=1 // pred_check_branch
      %436 = sbr.rel (0) target = $region49
    $region48: #{tpu_custom_call.1} parent=1 // pred_region
      %437 = dma.done [#allocation4], 256
    $region49: #{tpu_custom_call.1} parent=1 // pred_fallthru
      _
    %438 = vsyncpa [#allocation3], 1
    %439 = vsyncpa [#allocation6], 1
    %440 = vsyncpa [#allocation9], 1
    %441 = vsyncpa [#allocation4], 1

</llo_original>
